<compile_context>
chip_gen: v5e
topology: v5e:2x2
jax: 0.10.0
libtpu: 0.0.40
codegen_flags: <defaults>
</compile_context>

<pallas_src>
import math

import jax
import jax.numpy as jnp
from jax.experimental import pallas as pl
from jax.experimental.pallas import tpu as pltpu


_TARGET_BLOCK_BYTES = 4 * 1024 * 1024     # ~4 MiB per block (2 arrays x 2 bufs = 16 MiB)
_VMEM_LIMIT_BYTES = 40 * 1024 * 1024      # fits v7x's 64 MiB/TC with headroom; plenty on v5e/v6e
_SMALL_INPUT_BYTES = 256 * 1024           # below this, plain XLA add beats a Pallas launch


# ----------------------------- kernel ----------------------------------------

def _bias_add_kernel(x_ref, b_ref, o_ref):
    # x: (tr, W); b: (1, W) row bias OR (tr, 1) column bias.  Pure VPU broadcast add.
    o_ref[...] = x_ref[...] + b_ref[...]


# ----------------------------- helpers ----------------------------------------

def _row_granularity(dtype):
    # min sublane granularity: 8 rows for 32-bit, 16 for 16-bit, 32 for 8-bit.
    return max(8, 32 // jnp.dtype(dtype).itemsize)


def _pick_row_tile(n_rows, width, itemsize, gran):
    """Largest row tile (multiple of `gran`) whose block is ~<= _TARGET_BLOCK_BYTES,
    while guaranteeing >= 2 grid steps whenever the tensor spans > 1 block."""
    total = n_rows * width * itemsize
    if total <= _TARGET_BLOCK_BYTES:
        return n_rows                                   # single full block
    rows = _TARGET_BLOCK_BYTES // max(1, width * itemsize)
    rows = max(gran, (rows // gran) * gran)
    if n_rows >= 2 * gran:
        # cap at ~half the rows (rounded up to gran) -> grid >= 2 for v7x megacore
        half = -(-n_rows // 2)
        half = -(-half // gran) * gran
        rows = min(rows, half)
    return min(rows, n_rows)


def _maybe_pack_lanes(n_rows, c, itemsize, gran):
    """Lane-dense width W (multiple of both c and 128) if a clean reshape exists.
    Cap is the full block-width budget so common odd channel counts still pack."""
    if c % 128 == 0:
        return None                                     # already lane-dense
    max_width = max(128, _TARGET_BLOCK_BYTES // max(1, gran * itemsize))
    w = (c * 128) // math.gcd(c, 128)                   # lcm(c, 128)
    if w > max_width:
        return None
    if (n_rows * c) % w != 0:
        return None
    return w


def _mosaic_params(n_grid_axes):
    return pltpu.CompilerParams(
        dimension_semantics=("parallel",) * n_grid_axes,
        vmem_limit_bytes=_VMEM_LIMIT_BYTES,
    )


# ----------------------------- pallas_call wrappers ---------------------------

def _bias_add_row_call(x2, brow):
    """x2: (R, W), brow: (1, W) -- bias broadcast over rows."""
    r, w = x2.shape
    itemsize = x2.dtype.itemsize
    gran = _row_granularity(x2.dtype)
    tr = _pick_row_tile(r, w, itemsize, gran)
    grid = (pl.cdiv(r, tr),)
    return pl.pallas_call(
        _bias_add_kernel,
        out_shape=jax.ShapeDtypeStruct((r, w), x2.dtype),
        grid_spec=pltpu.PrefetchScalarGridSpec(
            num_scalar_prefetch=0,
            grid=grid,
            in_specs=[
                pl.BlockSpec((tr, w), lambda i: (i, 0)),
                pl.BlockSpec((1, w), lambda i: (0, 0)),
            ],
            out_specs=pl.BlockSpec((tr, w), lambda i: (i, 0)),
        ),
        compiler_params=_mosaic_params(1),
        cost_estimate=pl.CostEstimate(
            flops=r * w, transcendentals=0,
            bytes_accessed=(2 * r * w + w) * itemsize),
    )(x2, brow)


def _bias_add_col_call(x2, bcol):
    """x2: (R, W), bcol: (R, 1) -- per-row bias broadcast along the last dim."""
    r, w = x2.shape
    itemsize = x2.dtype.itemsize
    gran = _row_granularity(x2.dtype)
    tr = _pick_row_tile(r, w, itemsize, gran)
    grid = (pl.cdiv(r, tr),)
    return pl.pallas_call(
        _bias_add_kernel,
        out_shape=jax.ShapeDtypeStruct((r, w), x2.dtype),
        grid_spec=pltpu.PrefetchScalarGridSpec(
            num_scalar_prefetch=0,
            grid=grid,
            in_specs=[
                pl.BlockSpec((tr, w), lambda i: (i, 0)),
                pl.BlockSpec((tr, 1), lambda i: (i, 0)),
            ],
            out_specs=pl.BlockSpec((tr, w), lambda i: (i, 0)),
        ),
        compiler_params=_mosaic_params(1),
        cost_estimate=pl.CostEstimate(
            flops=r * w, transcendentals=0,
            bytes_accessed=(2 * r * w + r) * itemsize),
    )(x2, bcol)


def _bias_add_last(x2, bias):
    """x2: (R, C) channels-last, bias: (1, C)."""
    r, c = x2.shape
    brow = bias.astype(x2.dtype)
    itemsize = x2.dtype.itemsize
    gran = _row_granularity(x2.dtype)
    w = _maybe_pack_lanes(r, c, itemsize, gran)
    if w is not None:
        # lane-dense repack: rows of width lcm(C, 128); bias pattern repeats with period C.
        reps = w // c
        xp = x2.reshape((r * c) // w, w)
        bp = jnp.tile(brow, (1, reps))
        return _bias_add_row_call(xp, bp).reshape(r, c)
    return _bias_add_row_call(x2, brow)


def _bias_add_channel(x4, bias):
    """x4: (B, C, H, W) NCHW, bias: (1, C)."""
    b, c, h, wd = x4.shape
    hw = h * wd
    # Merge B into the row axis -> full 8-sublane tiles, big blocks, >=2 grid
    # steps for megacore.  Row index = b*C + c, so the bias column is bias
    # tiled over B (a few KiB at most).
    x2 = x4.reshape(b * c, hw)
    bcol = jnp.tile(bias.reshape(c, 1).astype(x4.dtype), (b, 1))
    return _bias_add_col_call(x2, bcol).reshape(b, c, h, wd)


# ----------------------------- public API -------------------------------------

def learnable_bias(x, bias, *, force_pallas=False):
    """Pallas equivalent of LearnableBias.forward. bias has shape (1, out_chn)."""
    if bias.ndim != 2 or bias.shape[0] != 1:
        raise ValueError("bias must have shape (1, out_chn)")
    c = bias.shape[1]
    small = (not force_pallas) and (x.size * x.dtype.itemsize) < _SMALL_INPUT_BYTES

    if x.ndim == 2:
        if x.shape[1] != c:
            raise ValueError("Bias size does not match input features size:1d")
        if small:
            return x + bias.astype(x.dtype)
        return _bias_add_last(x, bias)
    elif x.ndim == 3:
        # TODO(synk): torch source references `self.bias3d` (a typo); implemented the
        # intended broadcast add of bias along the last (channel) dimension.
        if x.shape[2] != c:
            raise ValueError("Bias size does not match input channels size:2d")
        if small:
            return x + bias.astype(x.dtype)[:, None, :]
        b, l, _ = x.shape
        return _bias_add_last(x.reshape(b * l, c), bias).reshape(b, l, c)
    elif x.ndim == 4:
        if x.shape[1] != c:
            raise ValueError("Bias size does not match input channels size:3d")
        if small:
            return x + bias.astype(x.dtype)[0][None, :, None, None]
        return _bias_add_channel(x, bias)
    else:
        raise ValueError("Unsupported input dimension. Only 2D, 3D, and 4D inputs are supported.")


# ----------------------------- test harness -----------------------------------

def _reference(x, bias):
    if x.ndim == 2:
        return x + bias
    if x.ndim == 3:
        return x + bias[:, None, :]
    return x + bias[0][None, :, None, None]


if __name__ == "__main__":
    key = jax.random.PRNGKey(0)
    out_chn = 32

    kb, k2, k3, key = jax.random.split(key, 4)
    # deterministic "learned" bias (module init is zeros; perturb for a stronger test)
    bias32 = 0.1 * jax.random.normal(kb, (1, out_chn), dtype=jnp.float32)

    # 2-D: (batch, features) -- force the Pallas path (lane-packed to width 128)
    x2 = jax.random.normal(k2, (8, out_chn), dtype=jnp.float32)
    o2 = jax.block_until_ready(learnable_bias(x2, bias32, force_pallas=True))
    assert o2.shape == x2.shape
    assert jnp.allclose(o2, _reference(x2, bias32), atol=1e-6, rtol=1e-6)

    # 3-D: (batch, seq, channels) -- force the Pallas path
    x3 = jax.random.normal(k3, (2, 8, out_chn), dtype=jnp.float32)
    o3 = jax.block_until_ready(learnable_bias(x3, bias32, force_pallas=True))
    assert o3.shape == x3.shape
    assert jnp.allclose(o3, _reference(x3, bias32), atol=1e-6, rtol=1e-6)

    # 4-D: (batch, channels, H, W) -- force the Pallas (B*C, HW) column-bias path
    kb4, k4, key = jax.random.split(key, 3)
    bias4 = 0.1 * jax.random.normal(kb4, (1, 4), dtype=jnp.float32)
    x4 = jax.random.normal(k4, (2, 4, 16, 16), dtype=jnp.float32)
    o4 = jax.block_until_ready(learnable_bias(x4, bias4, force_pallas=True))
    assert o4.shape == x4.shape
    assert jnp.allclose(o4, _reference(x4, bias4), atol=1e-6, rtol=1e-6)

    # Moderate 2-D: multi-step grid + lane-dense (768 % 128 == 0), exercises tiling
    kbm, km, key = jax.random.split(key, 3)
    biasm = 0.1 * jax.random.normal(kbm, (1, 768), dtype=jnp.float32)
    xm = jax.random.normal(km, (4096, 768), dtype=jnp.float32)
    om = jax.block_until_ready(learnable_bias(xm, biasm))
    assert om.shape == xm.shape
    assert jnp.allclose(om, _reference(xm, biasm), atol=1e-6, rtol=1e-6)

    # Small-input fast path (plain XLA broadcast add)
    of = jax.block_until_ready(learnable_bias(x2, bias32))
    assert jnp.allclose(of, _reference(x2, bias32), atol=1e-6, rtol=1e-6)

    print("KERNEL_OK")
</pallas_src>

<mosaic_0001>
module attributes {stable_mosaic.version = 11 : i64} {
  func.func @_bias_add_kernel(%arg0: i32, %arg1: memref<2x128xf32, #tpu.memory_space<vmem>>, %arg2: memref<1x128xf32, #tpu.memory_space<vmem>>, %arg3: memref<2x128xf32, #tpu.memory_space<vmem>>) attributes {dimension_semantics = [#tpu.dimension_semantics<parallel>], iteration_bounds = array<i64: 1>, scalar_prefetch = 0 : i64, scratch_operands = 0 : i64, tpu.core_type = #tpu.core_type<tc>, window_params = [{transform_indices = @transform_0, window_bounds = array<i64: 2, 128>}, {pipeline_mode = #tpu.pipeline_mode<synchronous>, transform_indices = @transform_1, window_bounds = array<i64: 1, 128>}, {transform_indices = @transform_2, window_bounds = array<i64: 2, 128>}]} {
    %c0 = arith.constant 0 : index
    %c0_0 = arith.constant 0 : index
    %0 = vector.load %arg1[%c0, %c0_0] : memref<2x128xf32, #tpu.memory_space<vmem>>, vector<2x128xf32>
    %c0_1 = arith.constant 0 : index
    %c0_2 = arith.constant 0 : index
    %1 = vector.load %arg2[%c0_1, %c0_2] : memref<1x128xf32, #tpu.memory_space<vmem>>, vector<1x128xf32>
    %2 = vector.broadcast %1 : vector<1x128xf32> to vector<2x128xf32>
    %3 = arith.addf %0, %2 : vector<2x128xf32>
    %c0_3 = arith.constant 0 : index
    %c0_4 = arith.constant 0 : index
    %4 = vector.load %arg3[%c0_3, %c0_4] : memref<2x128xf32, #tpu.memory_space<vmem>>, vector<2x128xf32>
    tpu.vector_store %arg3[%c0_3, %c0_4], %3 {strides = array<i32>} : memref<2x128xf32, #tpu.memory_space<vmem>>, vector<2x128xf32>,
    return
  }
  func.func @transform_0(%arg0: i32) -> (i32, i32) {
    %c0_i32 = arith.constant 0 : i32
    %c0_i32_0 = arith.constant 0 : i32
    return %arg0, %c0_i32 : i32, i32
  }
  func.func @transform_1(%arg0: i32) -> (i32, i32) {
    %c0_i32 = arith.constant 0 : i32
    %c0_i32_0 = arith.constant 0 : i32
    %c0_i32_1 = arith.constant 0 : i32
    return %c0_i32, %c0_i32_0 : i32, i32
  }
  func.func @transform_2(%arg0: i32) -> (i32, i32) {
    %c0_i32 = arith.constant 0 : i32
    %c0_i32_0 = arith.constant 0 : i32
    return %arg0, %c0_i32 : i32, i32
  }
}

</mosaic_0001>

<llo_original>
// kernel: tpu_custom_call.1
$region0: #{tpu_custom_call.1}
  #allocation0 [shape = 'u32[]', space=smem, size = 0x4, offset = 0x4, fixed_abs, tag = 'smem constant byte address 0x4 - core index']
  #allocation1 [shape = 'u32[72,128]{1,0:T(1,128)}', space=vmem, size = 0x9000, scoped, tag = 'internal scratch']
  %s0 = inlined_call_operand.hbm [shape: f32[2,128], index: 0, kind: input, shape index: {}]
  %s1 = inlined_call_operand.hbm [shape: f32[1,128], index: 1, kind: input, shape index: {}]
  %s2 = inlined_call_operand.hbm [shape: f32[2,128], index: 2, kind: output, shape index: {}]
  %s3 = sld [smem:[#allocation0]]
  $region26: #{tpu_custom_call.1} parent=0
    _
  %s5 = ssub.s32 1, %s3
  %s6 = scalar_select 0, %s5, %s3
  $region1: #{tpu_custom_call.1} parent=0
    #allocation2 [shape = 'u8[1024]{0}', space=vmem, size = 0x400, scoped, tag = 'input window, operand 0, single buffered']
    #allocation3 [shape = 's32[1]{0}', space=sflag, size = 0x4, scoped, tag = 'scoped memory for tpu_custom_call.1']
    #allocation4 [shape = 's32[1]{0}', space=sflag, size = 0x4, scoped, tag = 'scoped memory for tpu_custom_call.1']
    #allocation5 [shape = 'u8[512]{0}', space=vmem, size = 0x400, scoped, tag = 'input window, operand 1, single buffered']
    #allocation6 [shape = 's32[1]{0}', space=sflag, size = 0x4, scoped, tag = 'scoped memory for tpu_custom_call.1']
    #allocation7 [shape = 'u8[1024]{0}', space=vmem, size = 0x400, scoped, tag = 'output window, operand 0, single buffered']
    %7 = vsyncpa [#allocation3], 0
    %8 = vsyncpa [#allocation6], 0
    %9 = vsyncpa [#allocation4], 0
    // Predicated region
    $region2: #{tpu_custom_call.1} parent=1 // pred_check
      _
    $region3: #{tpu_custom_call.1} parent=1 // pred_check_branch
      %11 = sbr.rel (0) target = $region5
    $region4: #{tpu_custom_call.1} parent=1 // pred_region
      %13 = vsyncadd [#allocation3], 0
      %s15 = sshll.u32 %s0, 4
      %s16 = int_to_ptr.hbm [resolvable:$true] %s15
      %s17 = sshll.u32 [#allocation2], 4
      %s18 = int_to_ptr.vmem [resolvable:$true] %s17
      %20 = dma.hbm_to_vmem [thread:$0]  %s16, 32, %s18, [#allocation3]
    $region5: #{tpu_custom_call.1} parent=1 // pred_fallthru
      _
    // Predicated region
    $region6: #{tpu_custom_call.1} parent=1 // pred_check
      _
    $region7: #{tpu_custom_call.1} parent=1 // pred_check_branch
      %22 = sbr.rel (0) target = $region9
    $region8: #{tpu_custom_call.1} parent=1 // pred_region
      %24 = vsyncadd [#allocation6], 0
      %s26 = sshll.u32 %s1, 4
      %s27 = int_to_ptr.hbm [resolvable:$true] %s26
      %s28 = sshll.u32 [#allocation5], 4
      %s29 = int_to_ptr.vmem [resolvable:$true] %s28
      %31 = dma.hbm_to_vmem [thread:$0]  %s27, 16, %s29, [#allocation6]
    $region9: #{tpu_custom_call.1} parent=1 // pred_fallthru
      _
    // Predicated region
    $region10: #{tpu_custom_call.1} parent=1 // pred_check
      _
    $region11: #{tpu_custom_call.1} parent=1 // pred_check_branch
      %33 = sbr.rel (0) target = $region13
    $region12: #{tpu_custom_call.1} parent=1 // pred_region
      %35 = dma.done [#allocation3], 32
    $region13: #{tpu_custom_call.1} parent=1 // pred_fallthru
      _
    // Predicated region
    $region14: #{tpu_custom_call.1} parent=1 // pred_check
      _
    $region15: #{tpu_custom_call.1} parent=1 // pred_check_branch
      %37 = sbr.rel (0) target = $region17
    $region16: #{tpu_custom_call.1} parent=1 // pred_region
      %39 = dma.done [#allocation6], 16
    $region17: #{tpu_custom_call.1} parent=1 // pred_fallthru
      _
    %v40 = vld [vmem:[#allocation2] sm:$0x3]
    %v41 = vld [vmem:[#allocation5] sm:$0x1]
    %v43 = vperm.slane %v41, 0
    %v45 = vadd.f32 %v40, %v43
    %46 = vst [vmem:[#allocation7] sm:$0x3] %v45
    // Predicated region
    $region18: #{tpu_custom_call.1} parent=1 // pred_check
      _
    $region19: #{tpu_custom_call.1} parent=1 // pred_check_branch
      %48 = sbr.rel (0) target = $region21
    $region20: #{tpu_custom_call.1} parent=1 // pred_region
      %50 = vsyncadd [#allocation4], 0
      %s52 = sshll.u32 [#allocation7], 4
      %s53 = int_to_ptr.vmem [resolvable:$true] %s52
      %s54 = sshll.u32 %s2, 4
      %s55 = int_to_ptr.hbm [resolvable:$true] %s54
      %57 = dma.vmem_to_hbm [thread:$0]  %s53, 32, %s55, [#allocation4]
    $region21: #{tpu_custom_call.1} parent=1 // pred_fallthru
      _
    // Predicated region
    $region22: #{tpu_custom_call.1} parent=1 // pred_check
      _
    $region23: #{tpu_custom_call.1} parent=1 // pred_check_branch
      %59 = sbr.rel (0) target = $region25
    $region24: #{tpu_custom_call.1} parent=1 // pred_region
      %61 = dma.done [#allocation4], 32
    $region25: #{tpu_custom_call.1} parent=1 // pred_fallthru
      _
    %62 = vsyncpa [#allocation3], 1
    %63 = vsyncpa [#allocation6], 1
    %64 = vsyncpa [#allocation4], 1

</llo_original>
